<compile_context>
chip_gen: v7x
topology: tpu7x:2x2x1
jax: 0.10.0
libtpu: 0.0.40
codegen_flags: <defaults>
</compile_context>

<pallas_src>
import functools

import jax
import jax.numpy as jnp
from jax.experimental import pallas as pl
from jax.experimental.pallas import tpu as pltpu


def _round_up(a: int, b: int) -> int:
    return ((a + b - 1) // b) * b


def _vmem_capacity_bytes() -> int:
    """Physical VMEM per TensorCore, with a conservative (v7x-sized) fallback."""
    try:
        info = pltpu.get_tpu_info()
        cap = getattr(info, "vmem_capacity_bytes", None)
        if cap:
            return int(cap)
    except Exception:
        pass
    return 64 * 1024 * 1024


def _tensorcores_per_chip() -> int:
    try:
        kind = jax.devices()[0].device_kind.lower()
        if "v7" in kind:
            return 2
    except Exception:
        pass
    return 1


def st_projector_kernel(x_ref, w1_ref, b1_ref, w2_ref, b2_ref, o_ref):
    # In-kernel cast of x (rides the VPU slot under the MXU; avoids a bf16 copy of x in HBM).
    x = x_ref[...].astype(w1_ref.dtype)
    # hidden = relu(x @ W1 + b1); f32 accumulation on the MXU.
    h = jnp.dot(x, w1_ref[...], preferred_element_type=jnp.float32)
    h = jnp.maximum(h + b1_ref[...], 0.0)
    # proj = hidden @ W2 + b2.
    y = jnp.dot(h.astype(w2_ref.dtype), w2_ref[...],
                preferred_element_type=jnp.float32)
    y = y + b2_ref[...]
    # F.normalize(y, p=2, dim=-1): y / max(||y||, 1e-12) == y * rsqrt(max(sum(y^2), 1e-24)).
    sumsq = jnp.sum(y * y, axis=-1, keepdims=True)
    inv = jax.lax.rsqrt(jnp.maximum(sumsq, 1e-24))
    o_ref[...] = (y * inv).astype(o_ref.dtype)


@functools.partial(jax.jit, static_argnames=("tm", "matmul_dtype", "out_dtype"))
def st_projector(x, w1, b1, w2, b2, *, tm=1024, matmul_dtype=jnp.bfloat16,
                 out_dtype=None):
    """x: (B, N, C_in) float32. w1: (C_in, C_hid), w2: (C_hid, C_out) (transposed vs torch).
    Returns (B, N, C_out), L2-normalized over the last dim, in `out_dtype`
    (defaults to `matmul_dtype`: bf16 on the perf path, f32 on the exact path)."""
    B, N, C_in = x.shape
    C_hid = w1.shape[1]
    C_out = w2.shape[1]
    M = B * N
    if out_dtype is None:
        out_dtype = matmul_dtype

    mm_item = jnp.dtype(matmul_dtype).itemsize
    out_item = jnp.dtype(out_dtype).itemsize
    x_item = x.dtype.itemsize

    # x stays in its HBM dtype; only the (small) weights get a one-time cast in the wrapper.
    x2d = x.reshape(M, C_in)
    w1 = w1.astype(matmul_dtype)
    w2 = w2.astype(matmul_dtype)
    b1_2d = b1.reshape(1, C_hid).astype(jnp.float32)
    b2_2d = b2.reshape(1, C_out).astype(jnp.float32)

    # ---- row tile: as large as possible, multiple of 256 when M allows (bf16 sublane
    # packing + full MXU M dimension), otherwise a single multiple-of-16 tile covering M.
    M16 = _round_up(M, 16)
    if M16 >= 256:
        tm_eff = max(256, (min(tm, M16) // 256) * 256)
    else:
        tm_eff = M16

    def vmem_estimate(rows):
        tiles = 2 * rows * (C_in * x_item + C_out * out_item)        # double-buffered x / out
        weights = 2 * ((C_in * C_hid + C_hid * C_out) * mm_item
                       + (C_hid + C_out) * 4)                        # resident W/b (2x-buffered)
        scratch = 2 * rows * (C_hid + C_out) * 4                     # f32 h/y + epilogue temps
        return int(1.25 * (tiles + weights + scratch))               # compiler-temp margin

    cap = _vmem_capacity_bytes()
    budget = cap // 2                       # ~32 MiB on v7x (64 MiB), ~64 MiB on v5e/v6e (128 MiB)
    floor_tm = min(256, tm_eff)
    while vmem_estimate(tm_eff) > budget and tm_eff > floor_tm:
        tm_eff = max(floor_tm, (tm_eff // 2 // 16) * 16)
    # TODO(synk): if C_in/C_hid grow to 2048+, tile the contraction (K) axis last in the grid
    # ("arbitrary") with a pl.when-initialized f32 VMEM accumulator instead of resident W1/W2.

    # Prefer >= 2 grid steps only on 2-TensorCore chips (v7x) so the "parallel" axis can be
    # sharded across both cores; on v5e/v6e (1 TC) an extra step is pure overhead.
    if _tensorcores_per_chip() > 1 and pl.cdiv(M, tm_eff) < 2 and M16 >= 512:
        tm_eff = max(256, _round_up(pl.cdiv(M16, 2), 256))

    grid = (pl.cdiv(M, tm_eff),)

    vmem_limit = int(min(max(int(1.5 * vmem_estimate(tm_eff)), 32 * 1024 * 1024),
                         min(96 * 1024 * 1024, int(cap * 0.625))))

    cost = pl.CostEstimate(
        flops=2 * M * (C_in * C_hid + C_hid * C_out),
        transcendentals=M,                                           # one rsqrt per row
        bytes_accessed=(M * C_in * x_item
                        + (C_in * C_hid + C_hid * C_out) * mm_item
                        + (C_hid + C_out) * 4
                        + M * C_out * out_item),
    )

    # TODO(synk): if a trace shows exposed DMA at step boundaries, add
    # pipeline_mode=pl.Buffered(3) on the x spec / pl.Buffered(1) on the constant-index weight
    # specs; at these weight sizes (<64 KiB resident) the VMEM saving is negligible.
    out = pl.pallas_call(
        st_projector_kernel,
        out_shape=jax.ShapeDtypeStruct((M, C_out), out_dtype),
        grid_spec=pltpu.PrefetchScalarGridSpec(
            num_scalar_prefetch=0,
            grid=grid,
            in_specs=[
                pl.BlockSpec((tm_eff, C_in), lambda i: (i, 0)),     # x row tile (partial tail OK)
                pl.BlockSpec((C_in, C_hid), lambda i: (0, 0)),      # W1 (resident)
                pl.BlockSpec((1, C_hid), lambda i: (0, 0)),         # b1
                pl.BlockSpec((C_hid, C_out), lambda i: (0, 0)),     # W2 (resident)
                pl.BlockSpec((1, C_out), lambda i: (0, 0)),         # b2
            ],
            out_specs=pl.BlockSpec((tm_eff, C_out), lambda i: (i, 0)),  # unpadded C_out
        ),
        compiler_params=pltpu.CompilerParams(
            dimension_semantics=("parallel",),
            vmem_limit_bytes=vmem_limit,
        ),
        cost_estimate=cost,
    )(x2d, w1, b1_2d, w2, b2_2d)

    return out.reshape(B, N, C_out)


def reference(x, w1, b1, w2, b2):
    h = jnp.maximum(x @ w1 + b1, 0.0)
    y = h @ w2 + b2
    denom = jnp.maximum(jnp.sqrt(jnp.sum(y * y, axis=-1, keepdims=True)), 1e-12)
    return y / denom


if __name__ == "__main__":
    # Small shapes consistent with the module (Linear(C_in,C_in) -> ReLU -> Linear(C_in,C_out)).
    # B*N = 74 is NOT tile-aligned (exercises the partial tail block); C_out < 128 exercises
    # the unpadded (lane-masked) output path.
    B, N = 2, 37
    C_in, C_out = 64, 32

    key = jax.random.PRNGKey(0)
    kx, kw1, kb1, kw2, kb2 = jax.random.split(key, 5)

    x = jax.random.normal(kx, (B, N, C_in), dtype=jnp.float32)

    # Deterministic PyTorch-Linear-style init: U(-1/sqrt(fan_in), 1/sqrt(fan_in)).
    bound = 1.0 / jnp.sqrt(jnp.float32(C_in))
    w1 = jax.random.uniform(kw1, (C_in, C_in), jnp.float32, -bound, bound)
    b1 = jax.random.uniform(kb1, (C_in,), jnp.float32, -bound, bound)
    w2 = jax.random.uniform(kw2, (C_in, C_out), jnp.float32, -bound, bound)
    b2 = jax.random.uniform(kb2, (C_out,), jnp.float32, -bound, bound)

    ref = reference(x, w1, b1, w2, b2)

    # Exact-precision path (f32 matmuls, f32 output) -- tight check.
    out_f32 = jax.block_until_ready(
        st_projector(x, w1, b1, w2, b2, matmul_dtype=jnp.float32))
    assert out_f32.shape == (B, N, C_out)
    assert out_f32.dtype == jnp.float32
    assert jnp.allclose(out_f32, ref, atol=1e-5, rtol=1e-5), "f32 kernel mismatch"

    # Performance path (bf16 matmul inputs, f32 accumulation, bf16 output) -- loose check.
    out_bf16 = jax.block_until_ready(st_projector(x, w1, b1, w2, b2))
    assert out_bf16.shape == (B, N, C_out)
    assert out_bf16.dtype == jnp.bfloat16
    err = float(jnp.max(jnp.abs(out_bf16.astype(jnp.float32) - ref)))
    assert err < 5e-2, f"bf16 kernel mismatch: {err}"

    print("KERNEL_OK")
</pallas_src>

<mosaic_0001>
module attributes {stable_mosaic.version = 11 : i64} {
  func.func @st_projector_kernel(%arg0: i32, %arg1: memref<80x64xf32, #tpu.memory_space<vmem>>, %arg2: memref<64x64xf32, #tpu.memory_space<vmem>>, %arg3: memref<1x64xf32, #tpu.memory_space<vmem>>, %arg4: memref<64x32xf32, #tpu.memory_space<vmem>>, %arg5: memref<1x32xf32, #tpu.memory_space<vmem>>, %arg6: memref<80x32xf32, #tpu.memory_space<vmem>>) attributes {dimension_semantics = [#tpu.dimension_semantics<parallel>], iteration_bounds = array<i64: 1>, scalar_prefetch = 0 : i64, scratch_operands = 0 : i64, tpu.core_type = #tpu.core_type<tc>, window_params = [{transform_indices = @transform_0, window_bounds = array<i64: 80, 64>}, {pipeline_mode = #tpu.pipeline_mode<synchronous>, transform_indices = @transform_1, window_bounds = array<i64: 64, 64>}, {pipeline_mode = #tpu.pipeline_mode<synchronous>, transform_indices = @transform_2, window_bounds = array<i64: 1, 64>}, {pipeline_mode = #tpu.pipeline_mode<synchronous>, transform_indices = @transform_3, window_bounds = array<i64: 64, 32>}, {pipeline_mode = #tpu.pipeline_mode<synchronous>, transform_indices = @transform_4, window_bounds = array<i64: 1, 32>}, {transform_indices = @transform_5, window_bounds = array<i64: 80, 32>}]} {
    %c0 = arith.constant 0 : index
    %c0_0 = arith.constant 0 : index
    %0 = vector.load %arg1[%c0, %c0_0] : memref<80x64xf32, #tpu.memory_space<vmem>>, vector<80x64xf32>
    %c0_1 = arith.constant 0 : index
    %c0_2 = arith.constant 0 : index
    %1 = vector.load %arg2[%c0_1, %c0_2] : memref<64x64xf32, #tpu.memory_space<vmem>>, vector<64x64xf32>
    %cst = arith.constant dense<0.000000e+00> : vector<80x64xf32>
    %2 = tpu.matmul %0, %1, %cst {dimension_numbers = #tpu.dot_dimension_numbers<[1], [0], [0], [1], [0, 0, 1, 1], [], []>} : vector<80x64xf32>, vector<64x64xf32>, vector<80x64xf32> -> vector<80x64xf32>
    %c0_3 = arith.constant 0 : index
    %c0_4 = arith.constant 0 : index
    %3 = vector.load %arg3[%c0_3, %c0_4] : memref<1x64xf32, #tpu.memory_space<vmem>>, vector<1x64xf32>
    %4 = vector.broadcast %3 : vector<1x64xf32> to vector<80x64xf32>
    %5 = arith.addf %2, %4 : vector<80x64xf32>
    %cst_5 = arith.constant 0.000000e+00 : f32
    %6 = vector.broadcast %cst_5 : f32 to vector<80x64xf32>
    %7 = arith.maximumf %5, %6 : vector<80x64xf32>
    %c0_6 = arith.constant 0 : index
    %c0_7 = arith.constant 0 : index
    %8 = vector.load %arg4[%c0_6, %c0_7] : memref<64x32xf32, #tpu.memory_space<vmem>>, vector<64x32xf32>
    %cst_8 = arith.constant dense<0.000000e+00> : vector<80x32xf32>
    %9 = tpu.matmul %7, %8, %cst_8 {dimension_numbers = #tpu.dot_dimension_numbers<[1], [0], [0], [1], [0, 0, 1, 1], [], []>} : vector<80x64xf32>, vector<64x32xf32>, vector<80x32xf32> -> vector<80x32xf32>
    %c0_9 = arith.constant 0 : index
    %c0_10 = arith.constant 0 : index
    %10 = vector.load %arg5[%c0_9, %c0_10] : memref<1x32xf32, #tpu.memory_space<vmem>>, vector<1x32xf32>
    %11 = vector.broadcast %10 : vector<1x32xf32> to vector<80x32xf32>
    %12 = arith.addf %9, %11 : vector<80x32xf32>
    %13 = arith.mulf %12, %12 : vector<80x32xf32>
    %cst_11 = arith.constant dense<0.000000e+00> : vector<80xf32>
    %14 = vector.multi_reduction <add>, %13, %cst_11 [1] : vector<80x32xf32> to vector<80xf32>
    %15 = vector.shape_cast %14 : vector<80xf32> to vector<80x1xf32>
    %cst_12 = arith.constant 1.000000e-24 : f32
    %16 = vector.broadcast %cst_12 : f32 to vector<80x1xf32>
    %17 = arith.maximumf %15, %16 : vector<80x1xf32>
    %18 = math.rsqrt %17 : vector<80x1xf32>
    %19 = vector.broadcast %18 : vector<80x1xf32> to vector<80x32xf32>
    %20 = arith.mulf %12, %19 : vector<80x32xf32>
    %c0_13 = arith.constant 0 : index
    %c0_14 = arith.constant 0 : index
    %21 = vector.load %arg6[%c0_13, %c0_14] : memref<80x32xf32, #tpu.memory_space<vmem>>, vector<80x32xf32>
    tpu.vector_store %arg6[%c0_13, %c0_14], %20 {strides = array<i32>} : memref<80x32xf32, #tpu.memory_space<vmem>>, vector<80x32xf32>,
    return
  }
  func.func @transform_0(%arg0: i32) -> (i32, i32) {
    %c0_i32 = arith.constant 0 : i32
    %c0_i32_0 = arith.constant 0 : i32
    return %arg0, %c0_i32 : i32, i32
  }
  func.func @transform_1(%arg0: i32) -> (i32, i32) {
    %c0_i32 = arith.constant 0 : i32
    %c0_i32_0 = arith.constant 0 : i32
    %c0_i32_1 = arith.constant 0 : i32
    return %c0_i32, %c0_i32_0 : i32, i32
  }
  func.func @transform_2(%arg0: i32) -> (i32, i32) {
    %c0_i32 = arith.constant 0 : i32
    %c0_i32_0 = arith.constant 0 : i32
    %c0_i32_1 = arith.constant 0 : i32
    return %c0_i32, %c0_i32_0 : i32, i32
  }
  func.func @transform_3(%arg0: i32) -> (i32, i32) {
    %c0_i32 = arith.constant 0 : i32
    %c0_i32_0 = arith.constant 0 : i32
    %c0_i32_1 = arith.constant 0 : i32
    return %c0_i32, %c0_i32_0 : i32, i32
  }
  func.func @transform_4(%arg0: i32) -> (i32, i32) {
    %c0_i32 = arith.constant 0 : i32
    %c0_i32_0 = arith.constant 0 : i32
    %c0_i32_1 = arith.constant 0 : i32
    return %c0_i32, %c0_i32_0 : i32, i32
  }
  func.func @transform_5(%arg0: i32) -> (i32, i32) {
    %c0_i32 = arith.constant 0 : i32
    %c0_i32_0 = arith.constant 0 : i32
    return %arg0, %c0_i32 : i32, i32
  }
}

</mosaic_0001>

<llo_original>
// kernel: st_projector.1
$region0: #{st_projector.1}
  #allocation0 [shape = 'u32[]', space=smem, size = 0x4, offset = 0x4, fixed_abs, tag = 'smem constant byte address 0x4 - core index']
  #allocation1 [shape = 'u32[144,128]{1,0:T(1,128)}', space=vmem, size = 0x12000, scoped, tag = 'internal scratch']
  %s0 = inlined_call_operand.vmem [shape: f32[74,64], index: 0, kind: input, shape index: {}]
  %s1 = inlined_call_operand.vmem [shape: f32[64,64], index: 1, kind: input, shape index: {}]
  %s2 = inlined_call_operand.vmem [shape: f32[1,64], index: 2, kind: input, shape index: {}]
  %s3 = inlined_call_operand.vmem [shape: f32[64,32], index: 3, kind: input, shape index: {}]
  %s4 = inlined_call_operand.vmem [shape: f32[1,32], index: 4, kind: input, shape index: {}]
  %s5 = inlined_call_operand.vmem [shape: f32[74,32], index: 5, kind: output, shape index: {}]
  %s6 = sld [smem:[#allocation0]]
  $region30: #{st_projector.1} parent=0
    _
  %s8 = ssub.s32 1, %s6
  %s9 = scalar_select 0, %s8, %s6
  // Predicated region
  $region2: #{st_projector.1} parent=0 // pred_check
    _
  $region3: #{st_projector.1} parent=0 // pred_check_branch
    %11 = sbr.rel (0) target = $region5
  $region4: #{st_projector.1} parent=0 // pred_region
    _
  $region5: #{st_projector.1} parent=0 // pred_fallthru
    _
  // Predicated region
  $region6: #{st_projector.1} parent=0 // pred_check
    _
  $region7: #{st_projector.1} parent=0 // pred_check_branch
    %13 = sbr.rel (0) target = $region9
  $region8: #{st_projector.1} parent=0 // pred_region
    _
  $region9: #{st_projector.1} parent=0 // pred_fallthru
    _
  // Predicated region
  $region10: #{st_projector.1} parent=0 // pred_check
    _
  $region11: #{st_projector.1} parent=0 // pred_check_branch
    %15 = sbr.rel (0) target = $region13
  $region12: #{st_projector.1} parent=0 // pred_region
    _
  $region13: #{st_projector.1} parent=0 // pred_fallthru
    _
  // Predicated region
  $region14: #{st_projector.1} parent=0 // pred_check
    _
  $region15: #{st_projector.1} parent=0 // pred_check_branch
    %17 = sbr.rel (0) target = $region17
  $region16: #{st_projector.1} parent=0 // pred_region
    _
  $region17: #{st_projector.1} parent=0 // pred_fallthru
    _
  // Predicated region
  $region18: #{st_projector.1} parent=0 // pred_check
    _
  $region19: #{st_projector.1} parent=0 // pred_check_branch
    %19 = sbr.rel (0) target = $region21
  $region20: #{st_projector.1} parent=0 // pred_region
    _
  $region21: #{st_projector.1} parent=0 // pred_fallthru
    _
  %v20 = vld [vmem:[%s0] sm:$0xff]
  %v21 = vld [vmem:[%s0 + $0x8] sm:$0xff]
  %v22 = vld [vmem:[%s0 + $0x10] sm:$0xff]
  %v23 = vld [vmem:[%s0 + $0x18] sm:$0xff]
  %v24 = vld [vmem:[%s0 + $0x20] sm:$0xff]
  %v25 = vld [vmem:[%s0 + $0x28] sm:$0xff]
  %v26 = vld [vmem:[%s0 + $0x30] sm:$0xff]
  %v27 = vld [vmem:[%s0 + $0x38] sm:$0xff]
  %v28 = vld [vmem:[%s0 + $0x40] sm:$0xff]
  %v29 = vld [vmem:[%s0 + $0x48] sm:$0xff]
  %v30 = vld [vmem:[%s1] sm:$0xff]
  %v31 = vld [vmem:[%s1 + $0x8] sm:$0xff]
  %v32 = vld [vmem:[%s1 + $0x10] sm:$0xff]
  %v33 = vld [vmem:[%s1 + $0x18] sm:$0xff]
  %v34 = vld [vmem:[%s1 + $0x20] sm:$0xff]
  %v35 = vld [vmem:[%s1 + $0x28] sm:$0xff]
  %v36 = vld [vmem:[%s1 + $0x30] sm:$0xff]
  %v37 = vld [vmem:[%s1 + $0x38] sm:$0xff]
  %v38 = vld [vmem:[%s2] sm:$0x1]
  %v40 = vlaneseq
  %v41 = vshrl.u32 %v40, 7
  %v42 = vsub.s32 0, %v41
  %v43 = vrot.slane %v38, %v42
  %vm45 = vcmask 523264
  %v47 = vsel %vm45, %v20, 0
  %v50 = vsel %vm45, %v21, 0
  %v53 = vsel %vm45, %v22, 0
  %v56 = vsel %vm45, %v23, 0
  %v59 = vsel %vm45, %v24, 0
  %v62 = vsel %vm45, %v25, 0
  %v65 = vsel %vm45, %v26, 0
  %v68 = vsel %vm45, %v27, 0
  %v71 = vsel %vm45, %v28, 0
  %v74 = vsel %vm45, %v29, 0
  %76 = vmatprep.subr.mxu0 0.0
  %77 = vmatpush1.msra.mxu0 %v30
  %78 = vmatprep.subr.mxu0 0.0
  %79 = vmatpush1.msra.mxu0 %v31
  %80 = vmatprep.subr.mxu0 0.0
  %81 = vmatpush1.msra.mxu0 %v32
  %82 = vmatprep.subr.mxu0 0.0
  %83 = vmatpush1.msra.mxu0 %v33
  %84 = vmatprep.subr.mxu0 0.0
  %85 = vmatpush1.msra.mxu0 %v34
  %86 = vmatprep.subr.mxu0 0.0
  %87 = vmatpush1.msra.mxu0 %v35
  %88 = vmatprep.subr.mxu0 0.0
  %89 = vmatpush1.msra.mxu0 %v36
  %90 = vmatprep.subr.mxu0 0.0
  %91 = vmatpush1.msra.mxu0 %v37
  %92 = vmatprep.subr.mxu0 0.0
  %93 = vmatpush1.msra.mxu0 0.0
  %94 = vmatprep.subr.mxu0 0.0
  %95 = vmatpush1.msra.mxu0 0.0
  %96 = vmatprep.subr.mxu0 0.0
  %97 = vmatpush1.msra.mxu0 0.0
  %98 = vmatprep.subr.mxu0 0.0
  %99 = vmatpush1.msra.mxu0 0.0
  %100 = vmatprep.subr.mxu0 0.0
  %101 = vmatpush1.msra.mxu0 0.0
  %102 = vmatprep.subr.mxu0 0.0
  %103 = vmatpush1.msra.mxu0 0.0
  %104 = vmatprep.subr.mxu0 0.0
  %105 = vmatpush1.msra.mxu0 0.0
  %106 = vmatprep.subr.mxu0 0.0
  %107 = vmatpush1.msra.mxu0 0.0
  %108 = vmatprep.subr.mxu0 0.0
  %109 = vmatpush1.msra.mxu0 0.0
  %110 = vmatprep.subr.mxu0 0.0
  %111 = vmatpush1.msra.mxu0 0.0
  %112 = vmatprep.subr.mxu0 0.0
  %113 = vmatpush1.msra.mxu0 0.0
  %114 = vmatprep.subr.mxu0 0.0
  %115 = vmatpush1.msra.mxu0 0.0
  %116 = vmatprep.subr.mxu0 0.0
  %117 = vmatpush1.msra.mxu0 0.0
  %118 = vmatprep.subr.mxu0 0.0
  %119 = vmatpush1.msra.mxu0 0.0
  %120 = vmatprep.subr.mxu0 0.0
  %121 = vmatpush1.msra.mxu0 0.0
  %122 = vmatprep.subr.mxu0 0.0
  %123 = vmatpush1.msra.mxu0 0.0
  %124 = vmatprep.subr.mxu0 0.0
  %125 = vmatpush1.msra.mxu0 0.0
  %126 = vmatprep.subr.mxu0 0.0
  %127 = vmatpush1.msra.mxu0 0.0
  %128 = vmatprep.subr.mxu0 0.0
  %129 = vmatpush1.msra.mxu0 0.0
  %130 = vmatprep.subr.mxu0 0.0
  %131 = vmatpush1.msra.mxu0 0.0
  %132 = vmatprep.subr.mxu0 0.0
  %133 = vmatpush1.msra.mxu0 0.0
  %134 = vmatprep.subr.mxu0 0.0
  %135 = vmatpush1.msra.mxu0 0.0
  %136 = vmatprep.subr.mxu0 0.0
  %137 = vmatpush1.msra.mxu0 0.0
  %138 = vmatprep.subr.mxu0 0.0
  %139 = vmatpush1.msra.mxu0 0.0
  %140 = vmatprep.mubr.f32.mxu0 0.0
  %141 = vmatmul.mubr.f32.gmra.mrb[0].mxu0 %v47
  %v142 = vpop.f32.mrb[0].mxu0
  %v143 = vadd.f32 %v43, %v142
  %v144 = vpop.f32.mrb[0].mxu0
  %145 = vmatprep.mubr.f32.mxu0 0.0
  %146 = vmatmul.mubr.f32.gmra.mrb[0].mxu0 %v50
  %v147 = vpop.f32.mrb[0].mxu0
  %v148 = vadd.f32 %v43, %v147
  %v149 = vpop.f32.mrb[0].mxu0
  %150 = vmatprep.mubr.f32.mxu0 0.0
  %151 = vmatmul.mubr.f32.gmra.mrb[0].mxu0 %v53
  %v152 = vpop.f32.mrb[0].mxu0
  %v153 = vadd.f32 %v43, %v152
  %v154 = vpop.f32.mrb[0].mxu0
  %155 = vmatprep.mubr.f32.mxu0 0.0
  %156 = vmatmul.mubr.f32.gmra.mrb[0].mxu0 %v56
  %v157 = vpop.f32.mrb[0].mxu0
  %v158 = vadd.f32 %v43, %v157
  %v159 = vpop.f32.mrb[0].mxu0
  %160 = vmatprep.mubr.f32.mxu0 0.0
  %161 = vmatmul.mubr.f32.gmra.mrb[0].mxu0 %v59
  %v162 = vpop.f32.mrb[0].mxu0
  %v163 = vadd.f32 %v43, %v162
  %v164 = vpop.f32.mrb[0].mxu0
  %165 = vmatprep.mubr.f32.mxu0 0.0
  %166 = vmatmul.mubr.f32.gmra.mrb[0].mxu0 %v62
  %v167 = vpop.f32.mrb[0].mxu0
  %v168 = vadd.f32 %v43, %v167
  %v169 = vpop.f32.mrb[0].mxu0
  %170 = vmatprep.mubr.f32.mxu0 0.0
  %171 = vmatmul.mubr.f32.gmra.mrb[0].mxu0 %v65
  %v172 = vpop.f32.mrb[0].mxu0
  %v173 = vadd.f32 %v43, %v172
  %v174 = vpop.f32.mrb[0].mxu0
  %175 = vmatprep.mubr.f32.mxu0 0.0
  %176 = vmatmul.mubr.f32.gmra.mrb[0].mxu0 %v68
  %v177 = vpop.f32.mrb[0].mxu0
  %v178 = vadd.f32 %v43, %v177
  %v179 = vpop.f32.mrb[0].mxu0
  %180 = vmatprep.mubr.f32.mxu0 0.0
  %181 = vmatmul.mubr.f32.gmra.mrb[0].mxu0 %v71
  %v182 = vpop.f32.mrb[0].mxu0
  %v183 = vadd.f32 %v43, %v182
  %v184 = vpop.f32.mrb[0].mxu0
  %185 = vmatprep.mubr.f32.mxu0 0.0
  %186 = vmatmul.mubr.f32.gmra.mrb[0].mxu0 %v74
  %v187 = vpop.f32.mrb[0].mxu0
  %v188 = vadd.f32 %v43, %v187
  %v189 = vpop.f32.mrb[0].mxu0
  %190 = vdwg.mxu0
  %v191 = vmax.f32 %v143, 0.0
  %v192 = vmax.f32 %v148, 0.0
  %v193 = vmax.f32 %v153, 0.0
  %v194 = vmax.f32 %v158, 0.0
  %v195 = vmax.f32 %v163, 0.0
  %v196 = vmax.f32 %v168, 0.0
  %v197 = vmax.f32 %v173, 0.0
  %v198 = vmax.f32 %v178, 0.0
  %v199 = vmax.f32 %v183, 0.0
  %v200 = vmax.f32 %v188, 0.0
  %v201 = vld [vmem:[%s3] sm:$0xff]
  %v202 = vld [vmem:[%s3 + $0x8] sm:$0xff]
  %v203 = vld [vmem:[%s3 + $0x10] sm:$0xff]
  %v204 = vld [vmem:[%s3 + $0x18] sm:$0xff]
  %v205 = vld [vmem:[%s3 + $0x20] sm:$0xff]
  %v206 = vld [vmem:[%s3 + $0x28] sm:$0xff]
  %v207 = vld [vmem:[%s3 + $0x30] sm:$0xff]
  %v208 = vld [vmem:[%s3 + $0x38] sm:$0xff]
  %v209 = vld [vmem:[%s4] sm:$0x1]
  %v211 = vlaneseq
  %v212 = vshrl.u32 %v211, 7
  %v213 = vsub.s32 0, %v212
  %v214 = vrot.slane %v209, %v213
  %v217 = vsel %vm45, %v191, 0
  %v220 = vsel %vm45, %v192, 0
  %v223 = vsel %vm45, %v193, 0
  %v226 = vsel %vm45, %v194, 0
  %v229 = vsel %vm45, %v195, 0
  %v232 = vsel %vm45, %v196, 0
  %v235 = vsel %vm45, %v197, 0
  %v238 = vsel %vm45, %v198, 0
  %v241 = vsel %vm45, %v199, 0
  %v244 = vsel %vm45, %v200, 0
  %246 = vmatprep.subr.mxu0 0.0
  %247 = vmatpush1.msra.mxu0 %v201
  %248 = vmatprep.subr.mxu0 0.0
  %249 = vmatpush1.msra.mxu0 %v202
  %250 = vmatprep.subr.mxu0 0.0
  %251 = vmatpush1.msra.mxu0 %v203
  %252 = vmatprep.subr.mxu0 0.0
  %253 = vmatpush1.msra.mxu0 %v204
  %254 = vmatprep.subr.mxu0 0.0
  %255 = vmatpush1.msra.mxu0 %v205
  %256 = vmatprep.subr.mxu0 0.0
  %257 = vmatpush1.msra.mxu0 %v206
  %258 = vmatprep.subr.mxu0 0.0
  %259 = vmatpush1.msra.mxu0 %v207
  %260 = vmatprep.subr.mxu0 0.0
  %261 = vmatpush1.msra.mxu0 %v208
  %262 = vmatprep.subr.mxu0 0.0
  %263 = vmatpush1.msra.mxu0 0.0
  %264 = vmatprep.subr.mxu0 0.0
  %265 = vmatpush1.msra.mxu0 0.0
  %266 = vmatprep.subr.mxu0 0.0
  %267 = vmatpush1.msra.mxu0 0.0
  %268 = vmatprep.subr.mxu0 0.0
  %269 = vmatpush1.msra.mxu0 0.0
  %270 = vmatprep.subr.mxu0 0.0
  %271 = vmatpush1.msra.mxu0 0.0
  %272 = vmatprep.subr.mxu0 0.0
  %273 = vmatpush1.msra.mxu0 0.0
  %274 = vmatprep.subr.mxu0 0.0
  %275 = vmatpush1.msra.mxu0 0.0
  %276 = vmatprep.subr.mxu0 0.0
  %277 = vmatpush1.msra.mxu0 0.0
  %278 = vmatprep.subr.mxu0 0.0
  %279 = vmatpush1.msra.mxu0 0.0
  %280 = vmatprep.subr.mxu0 0.0
  %281 = vmatpush1.msra.mxu0 0.0
  %282 = vmatprep.subr.mxu0 0.0
  %283 = vmatpush1.msra.mxu0 0.0
  %284 = vmatprep.subr.mxu0 0.0
  %285 = vmatpush1.msra.mxu0 0.0
  %286 = vmatprep.subr.mxu0 0.0
  %287 = vmatpush1.msra.mxu0 0.0
  %288 = vmatprep.subr.mxu0 0.0
  %289 = vmatpush1.msra.mxu0 0.0
  %290 = vmatprep.subr.mxu0 0.0
  %291 = vmatpush1.msra.mxu0 0.0
  %292 = vmatprep.subr.mxu0 0.0
  %293 = vmatpush1.msra.mxu0 0.0
  %294 = vmatprep.subr.mxu0 0.0
  %295 = vmatpush1.msra.mxu0 0.0
  %296 = vmatprep.subr.mxu0 0.0
  %297 = vmatpush1.msra.mxu0 0.0
  %298 = vmatprep.subr.mxu0 0.0
  %299 = vmatpush1.msra.mxu0 0.0
  %300 = vmatprep.subr.mxu0 0.0
  %301 = vmatpush1.msra.mxu0 0.0
  %302 = vmatprep.subr.mxu0 0.0
  %303 = vmatpush1.msra.mxu0 0.0
  %304 = vmatprep.subr.mxu0 0.0
  %305 = vmatpush1.msra.mxu0 0.0
  %306 = vmatprep.subr.mxu0 0.0
  %307 = vmatpush1.msra.mxu0 0.0
  %308 = vmatprep.subr.mxu0 0.0
  %309 = vmatpush1.msra.mxu0 0.0
  %310 = vmatprep.mubr.f32.mxu0 0.0
  %311 = vmatmul.mubr.f32.gmra.mrb[0].mxu0 %v217
  %v312 = vpop.f32.mrb[0].mxu0
  %v313 = vadd.f32 %v214, %v312
  %v314 = vpop.f32.mrb[0].mxu0
  %315 = vmatprep.mubr.f32.mxu0 0.0
  %316 = vmatmul.mubr.f32.gmra.mrb[0].mxu0 %v220
  %v317 = vpop.f32.mrb[0].mxu0
  %v318 = vadd.f32 %v214, %v317
  %v319 = vpop.f32.mrb[0].mxu0
  %320 = vmatprep.mubr.f32.mxu0 0.0
  %321 = vmatmul.mubr.f32.gmra.mrb[0].mxu0 %v223
  %v322 = vpop.f32.mrb[0].mxu0
  %v323 = vadd.f32 %v214, %v322
  %v324 = vpop.f32.mrb[0].mxu0
  %325 = vmatprep.mubr.f32.mxu0 0.0
  %326 = vmatmul.mubr.f32.gmra.mrb[0].mxu0 %v226
  %v327 = vpop.f32.mrb[0].mxu0
  %v328 = vadd.f32 %v214, %v327
  %v329 = vpop.f32.mrb[0].mxu0
  %330 = vmatprep.mubr.f32.mxu0 0.0
  %331 = vmatmul.mubr.f32.gmra.mrb[0].mxu0 %v229
  %v332 = vpop.f32.mrb[0].mxu0
  %v333 = vadd.f32 %v214, %v332
  %v334 = vpop.f32.mrb[0].mxu0
  %335 = vmatprep.mubr.f32.mxu0 0.0
  %336 = vmatmul.mubr.f32.gmra.mrb[0].mxu0 %v232
  %v337 = vpop.f32.mrb[0].mxu0
  %v338 = vadd.f32 %v214, %v337
  %v339 = vpop.f32.mrb[0].mxu0
  %340 = vmatprep.mubr.f32.mxu0 0.0
  %341 = vmatmul.mubr.f32.gmra.mrb[0].mxu0 %v235
  %v342 = vpop.f32.mrb[0].mxu0
  %v343 = vadd.f32 %v214, %v342
  %v344 = vpop.f32.mrb[0].mxu0
  %345 = vmatprep.mubr.f32.mxu0 0.0
  %346 = vmatmul.mubr.f32.gmra.mrb[0].mxu0 %v238
  %v347 = vpop.f32.mrb[0].mxu0
  %v348 = vadd.f32 %v214, %v347
  %v349 = vpop.f32.mrb[0].mxu0
  %350 = vmatprep.mubr.f32.mxu0 0.0
  %351 = vmatmul.mubr.f32.gmra.mrb[0].mxu0 %v241
  %v352 = vpop.f32.mrb[0].mxu0
  %v353 = vadd.f32 %v214, %v352
  %v354 = vpop.f32.mrb[0].mxu0
  %355 = vmatprep.mubr.f32.mxu0 0.0
  %356 = vmatmul.mubr.f32.gmra.mrb[0].mxu0 %v244
  %v357 = vpop.f32.mrb[0].mxu0
  %v358 = vadd.f32 %v214, %v357
  %v359 = vpop.f32.mrb[0].mxu0
  %360 = vdwg.mxu0
  %v361 = vmul.f32 %v313, %v313
  %v362 = vmul.f32 %v318, %v318
  %v363 = vmul.f32 %v323, %v323
  %v364 = vmul.f32 %v328, %v328
  %v365 = vmul.f32 %v333, %v333
  %v366 = vmul.f32 %v338, %v338
  %v367 = vmul.f32 %v343, %v343
  %v368 = vmul.f32 %v348, %v348
  %v369 = vmul.f32 %v353, %v353
  %v370 = vmul.f32 %v358, %v358
  %vm371 = vcmask 261120
  %v372 = vsel %vm371, %v361, 0.0
  %373 = vadd.xlane.f32.xlu0 %v372
  %v374 = vpop.xlane.xlu0 %373
  %v375 = vsel %vm371, %v362, 0.0
  %376 = vadd.xlane.f32.xlu0 %v375
  %v377 = vpop.xlane.xlu0 %376
  %v378 = vsel %vm371, %v363, 0.0
  %379 = vadd.xlane.f32.xlu0 %v378
  %v380 = vpop.xlane.xlu0 %379
  %v381 = vsel %vm371, %v364, 0.0
  %382 = vadd.xlane.f32.xlu0 %v381
  %v383 = vpop.xlane.xlu0 %382
  %v384 = vsel %vm371, %v365, 0.0
  %385 = vadd.xlane.f32.xlu0 %v384
  %v386 = vpop.xlane.xlu0 %385
  %v387 = vsel %vm371, %v366, 0.0
  %388 = vadd.xlane.f32.xlu0 %v387
  %v389 = vpop.xlane.xlu0 %388
  %v390 = vsel %vm371, %v367, 0.0
  %391 = vadd.xlane.f32.xlu0 %v390
  %v392 = vpop.xlane.xlu0 %391
  %v393 = vsel %vm371, %v368, 0.0
  %394 = vadd.xlane.f32.xlu0 %v393
  %v395 = vpop.xlane.xlu0 %394
  %v396 = vsel %vm371, %v369, 0.0
  %397 = vadd.xlane.f32.xlu0 %v396
  %v398 = vpop.xlane.xlu0 %397
  %v399 = vsel %vm371, %v370, 0.0
  %400 = vadd.xlane.f32.xlu0 %v399
  %v401 = vpop.xlane.xlu0 %400
  %v402 = vmax.f32 %v374, 1e-24
  %v403 = vmax.f32 %v377, 1e-24
  %v404 = vmax.f32 %v380, 1e-24
  %v405 = vmax.f32 %v383, 1e-24
  %v406 = vmax.f32 %v386, 1e-24
  %v407 = vmax.f32 %v389, 1e-24
  %v408 = vmax.f32 %v392, 1e-24
  %v409 = vmax.f32 %v395, 1e-24
  %v410 = vmax.f32 %v398, 1e-24
  %v411 = vmax.f32 %v401, 1e-24
  %v412 = vrsqrt.pop %v402
  %v413 = vrsqrt.pop %v403
  %v414 = vrsqrt.pop %v404
  %v415 = vrsqrt.pop %v405
  %v416 = vrsqrt.pop %v406
  %v417 = vrsqrt.pop %v407
  %v418 = vrsqrt.pop %v408
  %v419 = vrsqrt.pop %v409
  %v420 = vrsqrt.pop %v410
  %v421 = vrsqrt.pop %v411
  %v422 = vmul.f32 %v313, %v412
  %v423 = vmul.f32 %v318, %v413
  %v424 = vmul.f32 %v323, %v414
  %v425 = vmul.f32 %v328, %v415
  %v426 = vmul.f32 %v333, %v416
  %v427 = vmul.f32 %v338, %v417
  %v428 = vmul.f32 %v343, %v418
  %v429 = vmul.f32 %v348, %v419
  %v430 = vmul.f32 %v353, %v420
  %v431 = vmul.f32 %v358, %v421
  %432 = vst.msk [vmem:[%s5] sm:$0xff] %vm371, %v422
  %433 = vst.msk [vmem:[%s5 + $0x8] sm:$0xff] %vm371, %v423
  %434 = vst.msk [vmem:[%s5 + $0x10] sm:$0xff] %vm371, %v424
  %435 = vst.msk [vmem:[%s5 + $0x18] sm:$0xff] %vm371, %v425
  %436 = vst.msk [vmem:[%s5 + $0x20] sm:$0xff] %vm371, %v426
  %437 = vst.msk [vmem:[%s5 + $0x28] sm:$0xff] %vm371, %v427
  %438 = vst.msk [vmem:[%s5 + $0x30] sm:$0xff] %vm371, %v428
  %439 = vst.msk [vmem:[%s5 + $0x38] sm:$0xff] %vm371, %v429
  %440 = vst.msk [vmem:[%s5 + $0x40] sm:$0xff] %vm371, %v430
  %441 = vst.msk [vmem:[%s5 + $0x48] sm:$0xff] %vm371, %v431
  // Predicated region
  $region22: #{st_projector.1} parent=0 // pred_check
    _
  $region23: #{st_projector.1} parent=0 // pred_check_branch
    %443 = sbr.rel (0) target = $region25
  $region24: #{st_projector.1} parent=0 // pred_region
    _
  $region25: #{st_projector.1} parent=0 // pred_fallthru
    _
  // Predicated region
  $region26: #{st_projector.1} parent=0 // pred_check
    _
  $region27: #{st_projector.1} parent=0 // pred_check_branch
    %445 = sbr.rel (0) target = $region29
  $region28: #{st_projector.1} parent=0 // pred_region
    _
  $region29: #{st_projector.1} parent=0 // pred_fallthru
    _

</llo_original>
